<compile_context>
chip_gen: v7x
topology: tpu7x:2x2x1
jax: 0.10.0
libtpu: 0.0.40
codegen_flags: <defaults>
</compile_context>

<pallas_src>
import jax
import jax.numpy as jnp
from jax.experimental import pallas as pl
from jax.experimental.pallas import tpu as pltpu


# Tiling targets (bytes).  x tile is double buffered along with the out tile and
# the (much smaller) pe tile: 2*8MiB + 2*8MiB + 2*2MiB ~= 36 MiB < 48 MiB budget,
# which leaves headroom under v7x's 64 MiB physical VMEM.
_LANE_TILE_TARGET_BYTES = 2 << 20   # per-row (pe) tile
_X_TILE_TARGET_BYTES = 8 << 20      # full (Bb, tn) x tile
_VMEM_LIMIT_BYTES = 48 * 1024 * 1024


def _pick_lane_tile(n, itemsize, target_bytes):
    """Largest multiple-of-128 divisor of n with tile_bytes <= target, else full n."""
    if n % 128 != 0:
        return n  # full-extent last dim is always legal
    m = n // 128
    max_mult = max(1, min(m, target_bytes // (128 * itemsize)))
    best = 1
    for d in range(1, max_mult + 1):
        if m % d == 0:
            best = d
    return 128 * best


def _pick_batch_tile(b, tn, itemsize, target_bytes):
    """Divisor of b that is a multiple of 8 (or b itself), fitting the tile budget."""
    cands = [b] + [d for d in range(8, b, 8) if b % d == 0]
    fitting = [c for c in cands if c * tn * itemsize <= target_bytes]
    if fitting:
        return max(fitting)
    return min(cands)


def posemb_kernel(x_ref, pe_ref, o_ref):
    # x_ref: (Bb, tn), pe_ref: (1, tn) -> broadcast over the folded batch rows.
    o_ref[...] = x_ref[...] + pe_ref[...]


def pos_emb_forward(x, pe):
    """x: (B, S, D), pe: (max_len, D). Returns x + pe[:S][None] (same dtype as x)."""
    B, S, D = x.shape
    pe_slice = pe[:S, :].astype(x.dtype)   # keep pe in x.dtype (matches torch add/out dtype)

    N = S * D
    itemsize = x.dtype.itemsize

    # Lane-dense 2D layout: pure layout plumbing outside the kernel.
    x2 = x.reshape(B, N)
    pe2 = pe_slice.reshape(1, N)

    tn = _pick_lane_tile(N, itemsize, _LANE_TILE_TARGET_BYTES)
    bb = _pick_batch_tile(B, tn, itemsize, _X_TILE_TARGET_BYTES)

    grid = (N // tn, B // bb)  # batch innermost so the pe block stays resident

    out2 = pl.pallas_call(
        posemb_kernel,
        out_shape=jax.ShapeDtypeStruct((B, N), x.dtype),
        grid_spec=pltpu.PrefetchScalarGridSpec(
            num_scalar_prefetch=0,
            grid=grid,
            in_specs=[
                pl.BlockSpec((bb, tn), lambda n, b: (b, n)),   # x: (batch tile, lane tile)
                pl.BlockSpec((1, tn), lambda n, b: (0, n)),    # pe: invariant over batch axis
            ],
            out_specs=pl.BlockSpec((bb, tn), lambda n, b: (b, n)),
        ),
        compiler_params=pltpu.CompilerParams(
            dimension_semantics=("parallel", "parallel"),
            vmem_limit_bytes=_VMEM_LIMIT_BYTES,
        ),
        cost_estimate=pl.CostEstimate(
            flops=B * N,
            transcendentals=0,
            bytes_accessed=(2 * B * N + N) * itemsize,
        ),
    )(x2, pe2)

    return out2.reshape(B, S, D)


if __name__ == "__main__":
    # Deterministic parameter init mirroring nn.Parameter(torch.randn(max_len, d_model) * 0.02)
    key = jax.random.PRNGKey(0)
    k_pe, k_x, k_pe2, k_x2, k_pe3, k_x3 = jax.random.split(key, 6)

    # Primary (module-consistent small shapes): batch=2, seq=8, d_model=32
    d_model, max_len = 32, 512
    batch, seq = 2, 8
    pe = jax.random.normal(k_pe, (max_len, d_model), dtype=jnp.float32) * 0.02
    x = jax.random.normal(k_x, (batch, seq, d_model), dtype=jnp.float32)
    out = jax.block_until_ready(pos_emb_forward(x, pe))
    ref = x + pe[:seq, :][None, :, :]
    assert out.shape == (batch, seq, d_model)
    assert jnp.allclose(out, ref, atol=1e-6, rtol=1e-6)

    # Secondary check: lane-aligned d_model (>= 128 path)
    pe_b = jax.random.normal(k_pe2, (64, 128), dtype=jnp.float32) * 0.02
    x_b = jax.random.normal(k_x2, (4, 16, 128), dtype=jnp.float32)
    out_b = jax.block_until_ready(pos_emb_forward(x_b, pe_b))
    ref_b = x_b + pe_b[:16, :][None, :, :]
    assert jnp.allclose(out_b, ref_b, atol=1e-6, rtol=1e-6)

    # Secondary check: awkward, non-128-divisible flattened size (falls back to full block)
    pe_c = jax.random.normal(k_pe3, (32, 48), dtype=jnp.float32) * 0.02
    x_c = jax.random.normal(k_x3, (3, 5, 48), dtype=jnp.float32)
    out_c = jax.block_until_ready(pos_emb_forward(x_c, pe_c))
    ref_c = x_c + pe_c[:5, :][None, :, :]
    assert jnp.allclose(out_c, ref_c, atol=1e-6, rtol=1e-6)

    print("KERNEL_OK")
</pallas_src>

<mosaic_0001>
module attributes {stable_mosaic.version = 11 : i64} {
  func.func @posemb_kernel(%arg0: i32, %arg1: i32, %arg2: memref<2x256xf32, #tpu.memory_space<vmem>>, %arg3: memref<1x256xf32, #tpu.memory_space<vmem>>, %arg4: memref<2x256xf32, #tpu.memory_space<vmem>>) attributes {dimension_semantics = [#tpu.dimension_semantics<parallel>, #tpu.dimension_semantics<parallel>], iteration_bounds = array<i64: 1, 1>, scalar_prefetch = 0 : i64, scratch_operands = 0 : i64, tpu.core_type = #tpu.core_type<tc>, window_params = [{transform_indices = @transform_0, window_bounds = array<i64: 2, 256>}, {transform_indices = @transform_1, window_bounds = array<i64: 1, 256>}, {transform_indices = @transform_2, window_bounds = array<i64: 2, 256>}]} {
    %c0 = arith.constant 0 : index
    %c0_0 = arith.constant 0 : index
    %0 = vector.load %arg2[%c0, %c0_0] : memref<2x256xf32, #tpu.memory_space<vmem>>, vector<2x256xf32>
    %c0_1 = arith.constant 0 : index
    %c0_2 = arith.constant 0 : index
    %1 = vector.load %arg3[%c0_1, %c0_2] : memref<1x256xf32, #tpu.memory_space<vmem>>, vector<1x256xf32>
    %2 = vector.broadcast %1 : vector<1x256xf32> to vector<2x256xf32>
    %3 = arith.addf %0, %2 : vector<2x256xf32>
    %c0_3 = arith.constant 0 : index
    %c0_4 = arith.constant 0 : index
    %4 = vector.load %arg4[%c0_3, %c0_4] : memref<2x256xf32, #tpu.memory_space<vmem>>, vector<2x256xf32>
    tpu.vector_store %arg4[%c0_3, %c0_4], %3 {strides = array<i32>} : memref<2x256xf32, #tpu.memory_space<vmem>>, vector<2x256xf32>,
    return
  }
  func.func @transform_0(%arg0: i32, %arg1: i32) -> (i32, i32) {
    %c0_i32 = arith.constant 0 : i32
    return %arg1, %arg0 : i32, i32
  }
  func.func @transform_1(%arg0: i32, %arg1: i32) -> (i32, i32) {
    %c0_i32 = arith.constant 0 : i32
    %c0_i32_0 = arith.constant 0 : i32
    return %c0_i32, %arg0 : i32, i32
  }
  func.func @transform_2(%arg0: i32, %arg1: i32) -> (i32, i32) {
    %c0_i32 = arith.constant 0 : i32
    return %arg1, %arg0 : i32, i32
  }
}

</mosaic_0001>

<llo_original>
// kernel: tpu_custom_call.1
$region0: #{tpu_custom_call.1}
  #allocation0 [shape = 'u32[]', space=smem, size = 0x4, offset = 0x4, fixed_abs, tag = 'smem constant byte address 0x4 - core index']
  #allocation1 [shape = 'u32[144,128]{1,0:T(1,128)}', space=vmem, size = 0x12000, scoped, tag = 'internal scratch']
  %s0 = inlined_call_operand.hbm [shape: f32[2,256], index: 0, kind: input, shape index: {}]
  %s1 = inlined_call_operand.vmem [shape: f32[1,256], index: 1, kind: input, shape index: {}]
  %s2 = inlined_call_operand.hbm [shape: f32[2,256], index: 2, kind: output, shape index: {}]
  %s3 = sld [smem:[#allocation0]]
  $region22: #{tpu_custom_call.1} parent=0
    _
  %s5 = ssub.s32 1, %s3
  %s6 = scalar_select 0, %s5, %s3
  $region1: #{tpu_custom_call.1} parent=0
    #allocation2 [shape = 'u8[2048]{0}', space=vmem, size = 0x800, scoped, tag = 'input window, operand 0, single buffered']
    #allocation3 [shape = 's32[1]{0}', space=sflag, size = 0x4, scoped, tag = 'scoped memory for tpu_custom_call.1']
    #allocation4 [shape = 's32[1]{0}', space=sflag, size = 0x4, scoped, tag = 'scoped memory for tpu_custom_call.1']
    #allocation5 [shape = 'u8[2048]{0}', space=vmem, size = 0x800, scoped, tag = 'output window, operand 0, single buffered']
    %7 = vsyncpa [#allocation3], 0
    %8 = vsyncpa [#allocation4], 0
    // Predicated region
    $region2: #{tpu_custom_call.1} parent=1 // pred_check
      _
    $region3: #{tpu_custom_call.1} parent=1 // pred_check_branch
      %10 = sbr.rel (0) target = $region5
    $region4: #{tpu_custom_call.1} parent=1 // pred_region
      %s12 = ssub.s32 64, 64
      %13 = vsyncadd [#allocation3], %s12
      %s15 = sshll.u32 [#allocation2], 4
      %s16 = int_to_ptr.vmem [resolvable:$true] %s15
      %18 = dma.hbm_to_vmem [thread:$0]  %s0, 64, %s16, [#allocation3]
    $region5: #{tpu_custom_call.1} parent=1 // pred_fallthru
      _
    // Predicated region
    $region6: #{tpu_custom_call.1} parent=1 // pred_check
      _
    $region7: #{tpu_custom_call.1} parent=1 // pred_check_branch
      %20 = sbr.rel (0) target = $region9
    $region8: #{tpu_custom_call.1} parent=1 // pred_region
      _
    $region9: #{tpu_custom_call.1} parent=1 // pred_fallthru
      _
    // Predicated region
    $region10: #{tpu_custom_call.1} parent=1 // pred_check
      _
    $region11: #{tpu_custom_call.1} parent=1 // pred_check_branch
      %22 = sbr.rel (0) target = $region13
    $region12: #{tpu_custom_call.1} parent=1 // pred_region
      %23 = dma.done [#allocation3], 64
    $region13: #{tpu_custom_call.1} parent=1 // pred_fallthru
      _
    %v24 = vld [vmem:[#allocation2] sm:$0xf]
    %v25 = vld [vmem:[%s1] sm:$0x3]
    %v27 = vlaneseq
    %v28 = vshrl.u32 %v27, 7
    %v29 = vsub.s32 0, %v28
    %v30 = vrot.slane %v25, %v29
    %v31 = vlaneseq
    %v32 = vshrl.u32 %v31, 7
    %v33 = vsub.s32 1, %v32
    %v34 = vrot.slane %v25, %v33
    %v35 = vcombine.low %v30, %v34
    %v37 = vunpack.c.l.s4 1983009808
    %v38 = vunpack.c.0.s8 %v37
    %v39 = vlaneseq
    %v40 = vshrl.u32 %v39, 7
    %v41 = vsub.s32 %v38, %v40
    %v42 = vrot.slane %v35, %v41
    %v44 = vadd.f32 %v24, %v42
    %45 = vst [vmem:[#allocation5] sm:$0xf] %v44
    // Predicated region
    $region14: #{tpu_custom_call.1} parent=1 // pred_check
      _
    $region15: #{tpu_custom_call.1} parent=1 // pred_check_branch
      %47 = sbr.rel (0) target = $region17
    $region16: #{tpu_custom_call.1} parent=1 // pred_region
      %s49 = ssub.s32 64, 64
      %50 = vsyncadd [#allocation4], %s49
      %s52 = sshll.u32 [#allocation5], 4
      %s53 = int_to_ptr.vmem [resolvable:$true] %s52
      %55 = dma.vmem_to_hbm [thread:$0]  %s53, 64, %s2, [#allocation4]
    $region17: #{tpu_custom_call.1} parent=1 // pred_fallthru
      _
    // Predicated region
    $region18: #{tpu_custom_call.1} parent=1 // pred_check
      _
    $region19: #{tpu_custom_call.1} parent=1 // pred_check_branch
      %57 = sbr.rel (0) target = $region21
    $region20: #{tpu_custom_call.1} parent=1 // pred_region
      %58 = dma.done [#allocation4], 64
    $region21: #{tpu_custom_call.1} parent=1 // pred_fallthru
      _
    %59 = vsyncpa [#allocation3], 1
    %60 = vsyncpa [#allocation4], 1

</llo_original>
